<compile_context>
chip_gen: v7x
topology: tpu7x:2x2x1
jax: 0.10.0
libtpu: 0.0.40
codegen_flags: <defaults>
</compile_context>

<pallas_src>
import jax
import jax.numpy as jnp
from jax.experimental import pallas as pl
from jax.experimental.pallas import tpu as pltpu

C_IN = 16   # Conv1d in_channels (fixed by the module)
K = 3       # Conv1d kernel size


def _mixa_kernel(x_ref, attn_ref, peak_ref, w_ref, b_ref, out_ref, aw_ref):
    # x_ref:    (Bt, C, L)  VMEM
    # attn_ref: (Bt, L)     VMEM (sublane-dense rows)
    # peak_ref: (Bt, L)     VMEM
    # w_ref:    (C, 3)      VMEM (conv weight, out-channel squeezed; resident)
    # b_ref:    (1,)        SMEM (conv bias scalar)
    # out_ref:  (Bt, C, L)  VMEM
    # aw_ref:   (Bt, L)     VMEM
    x = x_ref[...]
    attn = attn_ref[...]
    peak = peak_ref[...]
    w = w_ref[...]
    bias = b_ref[0]

    # ---- Conv1d(16 -> 1, k=3, pad=1): reduce over channels per tap first,
    # then shift the three (Bt, L) rows. Only (Bt, L)-sized intermediates. ----
    w0 = w[:, 0:1][None]                               # (1, C, 1)
    w1 = w[:, 1:2][None]
    w2 = w[:, 2:3][None]
    t0 = jnp.sum(x * w0, axis=1)                       # (Bt, L)  tap for x[l-1]
    t1 = jnp.sum(x * w1, axis=1)                       # (Bt, L)  tap for x[l]
    t2 = jnp.sum(x * w2, axis=1)                       # (Bt, L)  tap for x[l+1]

    # Zero-padded shifts: cheap 1-lane concats on (Bt, L) rows only.
    zcol = jnp.zeros_like(t0[:, :1])                   # (Bt, 1)
    t0_shift = jnp.concatenate([zcol, t0[:, :-1]], axis=-1)   # contributes t0[l-1]
    t2_shift = jnp.concatenate([t2[:, 1:], zcol], axis=-1)    # contributes t2[l+1]

    v = t0_shift + t1 + t2_shift + bias                # (Bt, L)

    # ---- sigmoid + additive attn/peak + softmax over L.  The block carries
    # the full L, so no padding mask is needed. ----
    a = jax.nn.sigmoid(v) + attn + peak
    m = jnp.max(a, axis=-1, keepdims=True)             # (Bt, 1)
    e = jnp.exp(a - m)
    s = jnp.sum(e, axis=-1, keepdims=True)             # (Bt, 1)
    # EUP reciprocal + one Newton step (on a (Bt, 1) vector, so ~free): keeps
    # the divide off the VALU while matching the exact result to ~1 ulp.
    r = pl.reciprocal(s, approx=True)
    r = r * (2.0 - s * r)
    aw = e * r                                         # (Bt, L)

    # ---- residual scaling: x * A + x == x * (A + 1) (single VALU pass) ----
    out_ref[...] = x * (aw[:, None, :] + 1.0)
    aw_ref[...] = aw


def _tpu_generation_params():
    """Return (vmem_limit_bytes, block_budget_bytes, assumed_tensorcores)."""
    vmem_bytes = None
    num_cores = 0
    try:
        info = pltpu.get_tpu_info()
        vmem_bytes = int(getattr(info, "vmem_capacity_bytes", 0)) or None
        num_cores = int(getattr(info, "num_cores", 0) or 0)
    except Exception:
        pass
    if vmem_bytes is None:
        vmem_bytes = 64 << 20                  # conservative: v7x per-TC VMEM
    if vmem_bytes >= (100 << 20):              # v5e / v6e: 128 MiB VMEM, 1 TC
        return 96 << 20, 80 << 20, max(num_cores, 1)
    # v7x-like: 64 MiB per TC, 2 TCs -- tie the block budget to the limit.
    return 44 << 20, 36 << 20, max(num_cores, 2)


def _pick_batch_tile(B, C, L, itemsize, block_budget_bytes, num_cores):
    """Batch rows per grid step.

    Candidates are divisors of B that keep the sublane-dense (Bt, L) attention
    blocks legal (Bt % 8 == 0 or Bt == B).  Pick the largest that fits the
    double-buffered VMEM block budget; on multi-TC chips (v7x) prefer an even
    step count >= 4 as long as per-step HBM traffic stays >= ~1 MiB.
    """
    io_bytes_per_row = (2 * C + 3) * L * itemsize        # in+out HBM bytes / batch row
    vmem_per_row = 2 * io_bytes_per_row                  # double-buffered blocks
    candidates = [d for d in range(1, B + 1)
                  if B % d == 0 and (d == B or d % 8 == 0)]
    fitting = [d for d in candidates if d * vmem_per_row <= block_budget_bytes]
    if not fitting:
        # Even the smallest legal tile busts the VMEM budget (very long L).
        # TODO(synk): add an L-tiled online-softmax path (second 'arbitrary'
        # grid axis with running max/sum scratch) for full-L blocks that do
        # not fit VMEM.
        return min(candidates)
    if num_cores >= 2:
        floor = 1 << 20   # keep per-step DMA >= ~1 MiB so step overhead stays hidden
        balanced = [d for d in fitting
                    if (B // d) >= 4 and (B // d) % 2 == 0
                    and d * io_bytes_per_row >= floor]
        if not balanced:
            balanced = [d for d in fitting
                        if (B // d) >= 2 and (B // d) % 2 == 0
                        and d * io_bytes_per_row >= floor]
        if balanced:
            return max(balanced)
    return max(fitting)


def mixa_forward(x, attn, peak, weight, bias):
    """x: (B, C, L) f32; attn, peak: (B, 1, L) f32; weight: (C, 3); bias: (1,)."""
    B, C, L = x.shape
    assert C == C_IN and weight.shape == (C_IN, K) and bias.shape == (1,)
    assert attn.shape == (B, 1, L) and peak.shape == (B, 1, L)

    # Free metadata reshapes: carry the attention rows sublane-dense as (B, L).
    attn2 = attn.reshape(B, L)
    peak2 = peak.reshape(B, L)

    vmem_limit, block_budget, n_cores = _tpu_generation_params()
    Bt = _pick_batch_tile(B, C, L, jnp.dtype(x.dtype).itemsize, block_budget, n_cores)
    grid = (B // Bt,)

    grid_spec = pltpu.PrefetchScalarGridSpec(
        num_scalar_prefetch=0,
        grid=grid,
        in_specs=[
            pl.BlockSpec((Bt, C, L), lambda b: (b, 0, 0)),      # x
            pl.BlockSpec((Bt, L), lambda b: (b, 0)),            # attn (sublane-dense)
            pl.BlockSpec((Bt, L), lambda b: (b, 0)),            # peak (sublane-dense)
            pl.BlockSpec((C, K), lambda b: (0, 0)),             # conv weight (resident)
            pl.BlockSpec(memory_space=pltpu.MemorySpace.SMEM),  # conv bias scalar
        ],
        out_specs=[
            pl.BlockSpec((Bt, C, L), lambda b: (b, 0, 0)),      # out
            pl.BlockSpec((Bt, L), lambda b: (b, 0)),            # A (sublane-dense)
        ],
    )
    out_shapes = (
        jax.ShapeDtypeStruct((B, C, L), x.dtype),
        jax.ShapeDtypeStruct((B, L), x.dtype),
    )
    out, aw = pl.pallas_call(
        _mixa_kernel,
        out_shape=out_shapes,
        grid_spec=grid_spec,
        compiler_params=pltpu.CompilerParams(
            dimension_semantics=("parallel",),
            vmem_limit_bytes=vmem_limit,
        ),
    )(x, attn2, peak2, weight, bias)

    # Free reshape back to the module's (B, 1, L) attention-weight shape.
    return out, aw.reshape(B, 1, L)


def ref_forward(x, attn, peak, weight, bias):
    """Plain-JAX reference (mirrors the PyTorch forward)."""
    B, C, L = x.shape
    xp = jnp.pad(x, ((0, 0), (0, 0), (1, 1)))
    v = (jnp.einsum('bcl,c->bl', xp[:, :, 0:L], weight[:, 0])
         + jnp.einsum('bcl,c->bl', xp[:, :, 1:L + 1], weight[:, 1])
         + jnp.einsum('bcl,c->bl', xp[:, :, 2:L + 2], weight[:, 2]))[:, None, :] + bias[0]
    a = jax.nn.sigmoid(v) + attn + peak
    aw = jax.nn.softmax(a, axis=-1)
    out = x * aw + x
    return out, aw


def _check(key, B, L):
    kx, ka, kp, kw, kb = jax.random.split(key, 5)
    x = jax.random.normal(kx, (B, C_IN, L), dtype=jnp.float32)
    attn = jax.random.normal(ka, (B, 1, L), dtype=jnp.float32)
    peak = jax.random.normal(kp, (B, 1, L), dtype=jnp.float32)
    # PyTorch weight shape (1, 16, 3) -> (16, 3); bias (1,).
    weight = 0.1 * jax.random.normal(kw, (C_IN, K), dtype=jnp.float32)
    bias = 0.1 * jax.random.normal(kb, (1,), dtype=jnp.float32)

    out, aw = mixa_forward(x, attn, peak, weight, bias)
    out = jax.block_until_ready(out)
    aw = jax.block_until_ready(aw)

    out_ref, aw_ref = ref_forward(x, attn, peak, weight, bias)
    assert jnp.allclose(out, out_ref, atol=2e-5, rtol=2e-5), f"output mismatch (B={B}, L={L})"
    assert jnp.allclose(aw, aw_ref, atol=2e-5, rtol=2e-5), f"attention-weight mismatch (B={B}, L={L})"


if __name__ == "__main__":
    key = jax.random.PRNGKey(0)
    k1, k2, k3 = jax.random.split(key, 3)
    # Main case: lane-aligned L, full batch per grid step.
    _check(k1, B=8, L=256)
    # L not a multiple of 128: handled in-kernel with full-L blocks (no wrapper
    # pad/slice HBM passes), lane-masked tail stores only.
    _check(k2, B=3, L=200)
    # Larger batch: exercises the divisor / multi-step tile selection.
    _check(k3, B=16, L=384)
    print("KERNEL_OK")
</pallas_src>

<mosaic_0001>
module attributes {stable_mosaic.version = 11 : i64} {
  func.func @_mixa_kernel(%arg0: i32, %arg1: memref<8x16x256xf32, #tpu.memory_space<vmem>>, %arg2: memref<8x256xf32, #tpu.memory_space<vmem>>, %arg3: memref<8x256xf32, #tpu.memory_space<vmem>>, %arg4: memref<16x3xf32, #tpu.memory_space<vmem>>, %arg5: memref<1xf32, #tpu.memory_space<smem>>, %arg6: memref<8x16x256xf32, #tpu.memory_space<vmem>>, %arg7: memref<8x256xf32, #tpu.memory_space<vmem>>) attributes {dimension_semantics = [#tpu.dimension_semantics<parallel>], iteration_bounds = array<i64: 1>, scalar_prefetch = 0 : i64, scratch_operands = 0 : i64, tpu.core_type = #tpu.core_type<tc>, window_params = [{transform_indices = @transform_0, window_bounds = array<i64: 8, 16, 256>}, {transform_indices = @transform_1, window_bounds = array<i64: 8, 256>}, {transform_indices = @transform_2, window_bounds = array<i64: 8, 256>}, {pipeline_mode = #tpu.pipeline_mode<synchronous>, transform_indices = @transform_3, window_bounds = array<i64: 16, 3>}, {transform_indices = @transform_4, window_bounds = array<i64: 1>}, {transform_indices = @transform_5, window_bounds = array<i64: 8, 16, 256>}, {transform_indices = @transform_6, window_bounds = array<i64: 8, 256>}]} {
    %c0 = arith.constant 0 : index
    %c0_0 = arith.constant 0 : index
    %c0_1 = arith.constant 0 : index
    %0 = vector.load %arg1[%c0, %c0_0, %c0_1] : memref<8x16x256xf32, #tpu.memory_space<vmem>>, vector<8x16x256xf32>
    %c0_2 = arith.constant 0 : index
    %c0_3 = arith.constant 0 : index
    %1 = vector.load %arg2[%c0_2, %c0_3] : memref<8x256xf32, #tpu.memory_space<vmem>>, vector<8x256xf32>
    %c0_4 = arith.constant 0 : index
    %c0_5 = arith.constant 0 : index
    %2 = vector.load %arg3[%c0_4, %c0_5] : memref<8x256xf32, #tpu.memory_space<vmem>>, vector<8x256xf32>
    %c0_6 = arith.constant 0 : index
    %c0_7 = arith.constant 0 : index
    %3 = vector.load %arg4[%c0_6, %c0_7] : memref<16x3xf32, #tpu.memory_space<vmem>>, vector<16x3xf32>
    %c0_8 = arith.constant 0 : index
    %4 = memref.load %arg5[%c0_8] : memref<1xf32, #tpu.memory_space<smem>>
    %5 = vector.extract_strided_slice %3 {offsets = [0, 0], sizes = [16, 1], strides = [1, 1]} : vector<16x3xf32> to vector<16x1xf32>
    %6 = vector.shape_cast %5 : vector<16x1xf32> to vector<1x16x1xf32>
    %7 = vector.extract_strided_slice %3 {offsets = [0, 1], sizes = [16, 1], strides = [1, 1]} : vector<16x3xf32> to vector<16x1xf32>
    %8 = vector.shape_cast %7 : vector<16x1xf32> to vector<1x16x1xf32>
    %9 = vector.extract_strided_slice %3 {offsets = [0, 2], sizes = [16, 1], strides = [1, 1]} : vector<16x3xf32> to vector<16x1xf32>
    %10 = vector.shape_cast %9 : vector<16x1xf32> to vector<1x16x1xf32>
    %11 = vector.broadcast %6 : vector<1x16x1xf32> to vector<8x16x256xf32>
    %12 = arith.mulf %0, %11 : vector<8x16x256xf32>
    %cst = arith.constant dense<0.000000e+00> : vector<8x256xf32>
    %13 = vector.multi_reduction <add>, %12, %cst [1] : vector<8x16x256xf32> to vector<8x256xf32>
    %14 = vector.broadcast %8 : vector<1x16x1xf32> to vector<8x16x256xf32>
    %15 = arith.mulf %0, %14 : vector<8x16x256xf32>
    %cst_9 = arith.constant dense<0.000000e+00> : vector<8x256xf32>
    %16 = vector.multi_reduction <add>, %15, %cst_9 [1] : vector<8x16x256xf32> to vector<8x256xf32>
    %17 = vector.broadcast %10 : vector<1x16x1xf32> to vector<8x16x256xf32>
    %18 = arith.mulf %0, %17 : vector<8x16x256xf32>
    %cst_10 = arith.constant dense<0.000000e+00> : vector<8x256xf32>
    %19 = vector.multi_reduction <add>, %18, %cst_10 [1] : vector<8x16x256xf32> to vector<8x256xf32>
    %cst_11 = arith.constant 0.000000e+00 : f32
    %20 = vector.broadcast %cst_11 : f32 to vector<8x1xf32>
    %21 = vector.extract_strided_slice %13 {offsets = [0, 0], sizes = [8, 255], strides = [1, 1]} : vector<8x256xf32> to vector<8x255xf32>
    %22 = tpu.concatenate %20, %21 in 1 : vector<8x1xf32>, vector<8x255xf32> -> vector<8x256xf32>
    %23 = vector.extract_strided_slice %19 {offsets = [0, 1], sizes = [8, 255], strides = [1, 1]} : vector<8x256xf32> to vector<8x255xf32>
    %24 = tpu.concatenate %23, %20 in 1 : vector<8x255xf32>, vector<8x1xf32> -> vector<8x256xf32>
    %25 = arith.addf %22, %16 : vector<8x256xf32>
    %26 = arith.addf %25, %24 : vector<8x256xf32>
    %27 = vector.broadcast %4 : f32 to vector<8x256xf32>
    %28 = arith.addf %26, %27 : vector<8x256xf32>
    %29 = arith.negf %28 : vector<8x256xf32>
    %30 = math.exp %29 : vector<8x256xf32>
    %cst_12 = arith.constant 1.000000e+00 : f32
    %31 = vector.broadcast %cst_12 : f32 to vector<8x256xf32>
    %32 = arith.addf %31, %30 : vector<8x256xf32>
    %33 = arith.divf %31, %32 : vector<8x256xf32>
    %34 = arith.addf %33, %1 : vector<8x256xf32>
    %35 = arith.addf %34, %2 : vector<8x256xf32>
    %cst_13 = arith.constant dense<0xFF800000> : vector<8xf32>
    %36 = vector.multi_reduction <maximumf>, %35, %cst_13 [1] : vector<8x256xf32> to vector<8xf32>
    %37 = vector.shape_cast %36 : vector<8xf32> to vector<8x1xf32>
    %38 = vector.broadcast %37 : vector<8x1xf32> to vector<8x256xf32>
    %39 = arith.subf %35, %38 : vector<8x256xf32>
    %40 = math.exp %39 : vector<8x256xf32>
    %cst_14 = arith.constant dense<0.000000e+00> : vector<8xf32>
    %41 = vector.multi_reduction <add>, %40, %cst_14 [1] : vector<8x256xf32> to vector<8xf32>
    %42 = vector.shape_cast %41 : vector<8xf32> to vector<8x1xf32>
    %43 = tpu.reciprocal %42 {approx = true} : vector<8x1xf32> -> vector<8x1xf32>
    %44 = arith.mulf %42, %43 : vector<8x1xf32>
    %cst_15 = arith.constant 2.000000e+00 : f32
    %45 = vector.broadcast %cst_15 : f32 to vector<8x1xf32>
    %46 = arith.subf %45, %44 : vector<8x1xf32>
    %47 = arith.mulf %43, %46 : vector<8x1xf32>
    %48 = vector.broadcast %47 : vector<8x1xf32> to vector<8x256xf32>
    %49 = arith.mulf %40, %48 : vector<8x256xf32>
    %50 = vector.shape_cast %49 : vector<8x256xf32> to vector<8x1x256xf32>
    %cst_16 = arith.constant 1.000000e+00 : f32
    %51 = vector.broadcast %cst_16 : f32 to vector<8x1x256xf32>
    %52 = arith.addf %50, %51 : vector<8x1x256xf32>
    %53 = vector.broadcast %52 : vector<8x1x256xf32> to vector<8x16x256xf32>
    %54 = arith.mulf %0, %53 : vector<8x16x256xf32>
    %c0_17 = arith.constant 0 : index
    %c0_18 = arith.constant 0 : index
    %c0_19 = arith.constant 0 : index
    %55 = vector.load %arg6[%c0_17, %c0_18, %c0_19] : memref<8x16x256xf32, #tpu.memory_space<vmem>>, vector<8x16x256xf32>
    tpu.vector_store %arg6[%c0_17, %c0_18, %c0_19], %54 {strides = array<i32>} : memref<8x16x256xf32, #tpu.memory_space<vmem>>, vector<8x16x256xf32>,
    %c0_20 = arith.constant 0 : index
    %c0_21 = arith.constant 0 : index
    %56 = vector.load %arg7[%c0_20, %c0_21] : memref<8x256xf32, #tpu.memory_space<vmem>>, vector<8x256xf32>
    tpu.vector_store %arg7[%c0_20, %c0_21], %49 {strides = array<i32>} : memref<8x256xf32, #tpu.memory_space<vmem>>, vector<8x256xf32>,
    return
  }
  func.func @transform_0(%arg0: i32) -> (i32, i32, i32) {
    %c0_i32 = arith.constant 0 : i32
    %c0_i32_0 = arith.constant 0 : i32
    %c0_i32_1 = arith.constant 0 : i32
    return %arg0, %c0_i32, %c0_i32_0 : i32, i32, i32
  }
  func.func @transform_1(%arg0: i32) -> (i32, i32) {
    %c0_i32 = arith.constant 0 : i32
    %c0_i32_0 = arith.constant 0 : i32
    return %arg0, %c0_i32 : i32, i32
  }
  func.func @transform_2(%arg0: i32) -> (i32, i32) {
    %c0_i32 = arith.constant 0 : i32
    %c0_i32_0 = arith.constant 0 : i32
    return %arg0, %c0_i32 : i32, i32
  }
  func.func @transform_3(%arg0: i32) -> (i32, i32) {
    %c0_i32 = arith.constant 0 : i32
    %c0_i32_0 = arith.constant 0 : i32
    %c0_i32_1 = arith.constant 0 : i32
    return %c0_i32, %c0_i32_0 : i32, i32
  }
  func.func @transform_4(%arg0: i32) -> i32 {
    %c0_i32 = arith.constant 0 : i32
    %c0_i32_0 = arith.constant 0 : i32
    return %c0_i32 : i32
  }
  func.func @transform_5(%arg0: i32) -> (i32, i32, i32) {
    %c0_i32 = arith.constant 0 : i32
    %c0_i32_0 = arith.constant 0 : i32
    %c0_i32_1 = arith.constant 0 : i32
    return %arg0, %c0_i32, %c0_i32_0 : i32, i32, i32
  }
  func.func @transform_6(%arg0: i32) -> (i32, i32) {
    %c0_i32 = arith.constant 0 : i32
    %c0_i32_0 = arith.constant 0 : i32
    return %arg0, %c0_i32 : i32, i32
  }
}

</mosaic_0001>

<llo_original>
// kernel: tpu_custom_call.1
$region0: #{tpu_custom_call.1}
  #allocation0 [shape = 'u32[]', space=smem, size = 0x4, offset = 0x4, fixed_abs, tag = 'smem constant byte address 0x4 - core index']
  #allocation1 [shape = 'u32[144,128]{1,0:T(1,128)}', space=vmem, size = 0x12000, scoped, tag = 'internal scratch']
  #allocation2 [shape = 'f32[1]{0:T(128)S(6)}', space=smem, size = 0x200, scoped, tag = 'scoped memory for tpu_custom_call.1']
  %s0 = inlined_call_operand.hbm [shape: f32[8,16,256], index: 0, kind: input, shape index: {}]
  %s1 = inlined_call_operand.vmem [shape: f32[8,256], index: 1, kind: input, shape index: {}]
  %s2 = inlined_call_operand.hbm [shape: f32[8,256], index: 2, kind: input, shape index: {}]
  %s3 = inlined_call_operand.vmem [shape: f32[16,3], index: 3, kind: input, shape index: {}]
  %s4 = inlined_call_operand.<no memory space> [shape: f32[1], index: 4, kind: input, shape index: {}]
  %s5 = inlined_call_operand.hbm [shape: f32[8,16,256], index: 5, kind: output, shape index: {0}]
  %s6 = inlined_call_operand.hbm [shape: f32[8,256], index: 6, kind: output, shape index: {1}]
  %7 = xla_tuple %s5, %s6
  %s8 = sld [smem:[#allocation0]]
  $region46: #{tpu_custom_call.1} parent=0
    _
  %s10 = ssub.s32 1, %s8
  %s11 = scalar_select 0, %s10, %s8
  %12 = sst [smem:[#allocation2]] %s4
  $region1: #{tpu_custom_call.1} parent=0
    #allocation3 [shape = 'u8[131072]{0}', space=vmem, size = 0x20000, scoped, tag = 'input window, operand 0, single buffered']
    #allocation4 [shape = 's32[1]{0}', space=sflag, size = 0x4, scoped, tag = 'scoped memory for tpu_custom_call.1']
    #allocation5 [shape = 's32[1]{0}', space=sflag, size = 0x4, scoped, tag = 'scoped memory for tpu_custom_call.1']
    #allocation6 [shape = 'u8[8192]{0}', space=vmem, size = 0x2000, scoped, tag = 'input window, operand 2, single buffered']
    #allocation7 [shape = 's32[1]{0}', space=sflag, size = 0x4, scoped, tag = 'scoped memory for tpu_custom_call.1']
    #allocation8 [shape = 'u8[131072]{0}', space=vmem, size = 0x20000, scoped, tag = 'output window, operand 0, single buffered']
    #allocation9 [shape = 'u8[8192]{0}', space=vmem, size = 0x2000, scoped, tag = 'output window, operand 1, single buffered']
    #allocation10 [shape = 's32[1]{0}', space=sflag, size = 0x4, scoped, tag = 'scoped memory for tpu_custom_call.1']
    %13 = vsyncpa [#allocation4], 0
    %14 = vsyncpa [#allocation7], 0
    %15 = vsyncpa [#allocation5], 0
    %16 = vsyncpa [#allocation10], 0
    // Predicated region
    $region2: #{tpu_custom_call.1} parent=1 // pred_check
      _
    $region3: #{tpu_custom_call.1} parent=1 // pred_check_branch
      %18 = sbr.rel (0) target = $region5
    $region4: #{tpu_custom_call.1} parent=1 // pred_region
      %s20 = ssub.s32 4096, 4096
      %21 = vsyncadd [#allocation4], %s20
      %s22 = sshll.u32 [#allocation3], 4
      %s23 = int_to_ptr.vmem [resolvable:$true] %s22
      %28 = dma.hbm_to_vmem [thread:$0]  %s0, 4096, %s23, [#allocation4], 256, 256, 16
    $region5: #{tpu_custom_call.1} parent=1 // pred_fallthru
      _
    // Predicated region
    $region6: #{tpu_custom_call.1} parent=1 // pred_check
      _
    $region7: #{tpu_custom_call.1} parent=1 // pred_check_branch
      %30 = sbr.rel (0) target = $region9
    $region8: #{tpu_custom_call.1} parent=1 // pred_region
      _
    $region9: #{tpu_custom_call.1} parent=1 // pred_fallthru
      _
    // Predicated region
    $region10: #{tpu_custom_call.1} parent=1 // pred_check
      _
    $region11: #{tpu_custom_call.1} parent=1 // pred_check_branch
      %32 = sbr.rel (0) target = $region13
    $region12: #{tpu_custom_call.1} parent=1 // pred_region
      %s34 = ssub.s32 256, 256
      %35 = vsyncadd [#allocation7], %s34
      %s37 = sshll.u32 [#allocation6], 4
      %s38 = int_to_ptr.vmem [resolvable:$true] %s37
      %40 = dma.hbm_to_vmem [thread:$0]  %s2, 256, %s38, [#allocation7]
    $region13: #{tpu_custom_call.1} parent=1 // pred_fallthru
      _
    // Predicated region
    $region14: #{tpu_custom_call.1} parent=1 // pred_check
      _
    $region15: #{tpu_custom_call.1} parent=1 // pred_check_branch
      %42 = sbr.rel (0) target = $region17
    $region16: #{tpu_custom_call.1} parent=1 // pred_region
      _
    $region17: #{tpu_custom_call.1} parent=1 // pred_fallthru
      _
    // Predicated region
    $region18: #{tpu_custom_call.1} parent=1 // pred_check
      _
    $region19: #{tpu_custom_call.1} parent=1 // pred_check_branch
      %44 = sbr.rel (0) target = $region21
    $region20: #{tpu_custom_call.1} parent=1 // pred_region
      _
    $region21: #{tpu_custom_call.1} parent=1 // pred_fallthru
      _
    // Predicated region
    $region22: #{tpu_custom_call.1} parent=1 // pred_check
      _
    $region23: #{tpu_custom_call.1} parent=1 // pred_check_branch
      %46 = sbr.rel (0) target = $region25
    $region24: #{tpu_custom_call.1} parent=1 // pred_region
      %47 = dma.done [#allocation4], 4096
    $region25: #{tpu_custom_call.1} parent=1 // pred_fallthru
      _
    // Predicated region
    $region26: #{tpu_custom_call.1} parent=1 // pred_check
      _
    $region27: #{tpu_custom_call.1} parent=1 // pred_check_branch
      %49 = sbr.rel (0) target = $region29
    $region28: #{tpu_custom_call.1} parent=1 // pred_region
      %50 = dma.done [#allocation7], 256
    $region29: #{tpu_custom_call.1} parent=1 // pred_fallthru
      _
    %v51 = vld [vmem:[#allocation3] sm:$0xff]
    %v52 = vld [vmem:[#allocation3 + $0x8] sm:$0xff]
    %v53 = vld [vmem:[#allocation3 + $0x10] sm:$0xff]
    %v54 = vld [vmem:[#allocation3 + $0x18] sm:$0xff]
    %v55 = vld [vmem:[#allocation3 + $0x20] sm:$0xff]
    %v56 = vld [vmem:[#allocation3 + $0x28] sm:$0xff]
    %v57 = vld [vmem:[#allocation3 + $0x30] sm:$0xff]
    %v58 = vld [vmem:[#allocation3 + $0x38] sm:$0xff]
    %v59 = vld [vmem:[#allocation3 + $0x40] sm:$0xff]
    %v60 = vld [vmem:[#allocation3 + $0x48] sm:$0xff]
    %v61 = vld [vmem:[#allocation3 + $0x50] sm:$0xff]
    %v62 = vld [vmem:[#allocation3 + $0x58] sm:$0xff]
    %v63 = vld [vmem:[#allocation3 + $0x60] sm:$0xff]
    %v64 = vld [vmem:[#allocation3 + $0x68] sm:$0xff]
    %v65 = vld [vmem:[#allocation3 + $0x70] sm:$0xff]
    %v66 = vld [vmem:[#allocation3 + $0x78] sm:$0xff]
    %v67 = vld [vmem:[#allocation3 + $0x80] sm:$0xff]
    %v68 = vld [vmem:[#allocation3 + $0x88] sm:$0xff]
    %v69 = vld [vmem:[#allocation3 + $0x90] sm:$0xff]
    %v70 = vld [vmem:[#allocation3 + $0x98] sm:$0xff]
    %v71 = vld [vmem:[#allocation3 + $0xa0] sm:$0xff]
    %v72 = vld [vmem:[#allocation3 + $0xa8] sm:$0xff]
    %v73 = vld [vmem:[#allocation3 + $0xb0] sm:$0xff]
    %v74 = vld [vmem:[#allocation3 + $0xb8] sm:$0xff]
    %v75 = vld [vmem:[#allocation3 + $0xc0] sm:$0xff]
    %v76 = vld [vmem:[#allocation3 + $0xc8] sm:$0xff]
    %v77 = vld [vmem:[#allocation3 + $0xd0] sm:$0xff]
    %v78 = vld [vmem:[#allocation3 + $0xd8] sm:$0xff]
    %v79 = vld [vmem:[#allocation3 + $0xe0] sm:$0xff]
    %v80 = vld [vmem:[#allocation3 + $0xe8] sm:$0xff]
    %v81 = vld [vmem:[#allocation3 + $0xf0] sm:$0xff]
    %v82 = vld [vmem:[#allocation3 + $0xf8] sm:$0xff]
    %v83 = vld [vmem:[%s1] sm:$0xff]
    %v84 = vld [vmem:[%s1 + $0x8] sm:$0xff]
    %v85 = vld [vmem:[#allocation6] sm:$0xff]
    %v86 = vld [vmem:[#allocation6 + $0x8] sm:$0xff]
    %v87 = vld [vmem:[%s3] sm:$0xff]
    %v88 = vld [vmem:[%s3 + $0x8] sm:$0xff]
    %s89 = sld [smem:[#allocation2]]
    %91 = vset.pattern.permute.xlu0 0
    %92 = vperm.xlu0 %91, %v87
    %v93 = vpop.permute.xlu0 %92
    %96 = vset.pattern.permute.xlu0 0
    %97 = vperm.xlu0 %96, %v88
    %v98 = vpop.permute.xlu0 %97
    %v100 = vmul.f32 %v51, %v93
    %v101 = vmul.f32 %v52, %v93
    %v102 = vmul.f32 %v53, %v98
    %v103 = vmul.f32 %v54, %v98
    %v104 = vmul.f32 %v55, %v93
    %v105 = vmul.f32 %v56, %v93
    %v106 = vmul.f32 %v57, %v98
    %v107 = vmul.f32 %v58, %v98
    %v108 = vmul.f32 %v59, %v93
    %v109 = vmul.f32 %v60, %v93
    %v110 = vmul.f32 %v61, %v98
    %v111 = vmul.f32 %v62, %v98
    %v112 = vmul.f32 %v63, %v93
    %v113 = vmul.f32 %v64, %v93
    %v114 = vmul.f32 %v65, %v98
    %v115 = vmul.f32 %v66, %v98
    %v116 = vmul.f32 %v67, %v93
    %v117 = vmul.f32 %v68, %v93
    %v118 = vmul.f32 %v69, %v98
    %v119 = vmul.f32 %v70, %v98
    %v120 = vmul.f32 %v71, %v93
    %v121 = vmul.f32 %v72, %v93
    %v122 = vmul.f32 %v73, %v98
    %v123 = vmul.f32 %v74, %v98
    %v124 = vmul.f32 %v75, %v93
    %v125 = vmul.f32 %v76, %v93
    %v126 = vmul.f32 %v77, %v98
    %v127 = vmul.f32 %v78, %v98
    %v128 = vmul.f32 %v79, %v93
    %v129 = vmul.f32 %v80, %v93
    %v130 = vmul.f32 %v81, %v98
    %v131 = vmul.f32 %v82, %v98
    %v132 = vadd.f32 %v100, %v102
    %v133 = vrot.slane %v132, 4
    %v134 = vadd.f32 %v132, %v133
    %v135 = vrot.slane %v134, 2
    %v136 = vadd.f32 %v134, %v135
    %v137 = vrot.slane %v136, 1
    %v138 = vadd.f32 %v136, %v137
    %v139 = vadd.f32 %v101, %v103
    %v140 = vrot.slane %v139, 4
    %v141 = vadd.f32 %v139, %v140
    %v142 = vrot.slane %v141, 2
    %v143 = vadd.f32 %v141, %v142
    %v144 = vrot.slane %v143, 1
    %v145 = vadd.f32 %v143, %v144
    %v146 = vadd.f32 %v104, %v106
    %v147 = vrot.slane %v146, 4
    %v148 = vadd.f32 %v146, %v147
    %v149 = vrot.slane %v148, 2
    %v150 = vadd.f32 %v148, %v149
    %v151 = vrot.slane %v150, 1
    %v152 = vadd.f32 %v150, %v151
    %v153 = vadd.f32 %v105, %v107
    %v154 = vrot.slane %v153, 4
    %v155 = vadd.f32 %v153, %v154
    %v156 = vrot.slane %v155, 2
    %v157 = vadd.f32 %v155, %v156
    %v158 = vrot.slane %v157, 1
    %v159 = vadd.f32 %v157, %v158
    %v160 = vadd.f32 %v108, %v110
    %v161 = vrot.slane %v160, 4
    %v162 = vadd.f32 %v160, %v161
    %v163 = vrot.slane %v162, 2
    %v164 = vadd.f32 %v162, %v163
    %v165 = vrot.slane %v164, 1
    %v166 = vadd.f32 %v164, %v165
    %v167 = vadd.f32 %v109, %v111
    %v168 = vrot.slane %v167, 4
    %v169 = vadd.f32 %v167, %v168
    %v170 = vrot.slane %v169, 2
    %v171 = vadd.f32 %v169, %v170
    %v172 = vrot.slane %v171, 1
    %v173 = vadd.f32 %v171, %v172
    %v174 = vadd.f32 %v112, %v114
    %v175 = vrot.slane %v174, 4
    %v176 = vadd.f32 %v174, %v175
    %v177 = vrot.slane %v176, 2
    %v178 = vadd.f32 %v176, %v177
    %v179 = vrot.slane %v178, 1
    %v180 = vadd.f32 %v178, %v179
    %v181 = vadd.f32 %v113, %v115
    %v182 = vrot.slane %v181, 4
    %v183 = vadd.f32 %v181, %v182
    %v184 = vrot.slane %v183, 2
    %v185 = vadd.f32 %v183, %v184
    %v186 = vrot.slane %v185, 1
    %v187 = vadd.f32 %v185, %v186
    %v188 = vadd.f32 %v116, %v118
    %v189 = vrot.slane %v188, 4
    %v190 = vadd.f32 %v188, %v189
    %v191 = vrot.slane %v190, 2
    %v192 = vadd.f32 %v190, %v191
    %v193 = vrot.slane %v192, 1
    %v194 = vadd.f32 %v192, %v193
    %v195 = vadd.f32 %v117, %v119
    %v196 = vrot.slane %v195, 4
    %v197 = vadd.f32 %v195, %v196
    %v198 = vrot.slane %v197, 2
    %v199 = vadd.f32 %v197, %v198
    %v200 = vrot.slane %v199, 1
    %v201 = vadd.f32 %v199, %v200
    %v202 = vadd.f32 %v120, %v122
    %v203 = vrot.slane %v202, 4
    %v204 = vadd.f32 %v202, %v203
    %v205 = vrot.slane %v204, 2
    %v206 = vadd.f32 %v204, %v205
    %v207 = vrot.slane %v206, 1
    %v208 = vadd.f32 %v206, %v207
    %v209 = vadd.f32 %v121, %v123
    %v210 = vrot.slane %v209, 4
    %v211 = vadd.f32 %v209, %v210
    %v212 = vrot.slane %v211, 2
    %v213 = vadd.f32 %v211, %v212
    %v214 = vrot.slane %v213, 1
    %v215 = vadd.f32 %v213, %v214
    %v216 = vadd.f32 %v124, %v126
    %v217 = vrot.slane %v216, 4
    %v218 = vadd.f32 %v216, %v217
    %v219 = vrot.slane %v218, 2
    %v220 = vadd.f32 %v218, %v219
    %v221 = vrot.slane %v220, 1
    %v222 = vadd.f32 %v220, %v221
    %v223 = vadd.f32 %v125, %v127
    %v224 = vrot.slane %v223, 4
    %v225 = vadd.f32 %v223, %v224
    %v226 = vrot.slane %v225, 2
    %v227 = vadd.f32 %v225, %v226
    %v228 = vrot.slane %v227, 1
    %v229 = vadd.f32 %v227, %v228
    %v230 = vadd.f32 %v128, %v130
    %v231 = vrot.slane %v230, 4
    %v232 = vadd.f32 %v230, %v231
    %v233 = vrot.slane %v232, 2
    %v234 = vadd.f32 %v232, %v233
    %v235 = vrot.slane %v234, 1
    %v236 = vadd.f32 %v234, %v235
    %v237 = vadd.f32 %v129, %v131
    %v238 = vrot.slane %v237, 4
    %v239 = vadd.f32 %v237, %v238
    %v240 = vrot.slane %v239, 2
    %v241 = vadd.f32 %v239, %v240
    %v242 = vrot.slane %v241, 1
    %v243 = vadd.f32 %v241, %v242
    %244 = vset.pattern.permute.xlu0 1
    %245 = vperm.xlu0 %244, %v87
    %v246 = vpop.permute.xlu0 %245
    %248 = vset.pattern.permute.xlu0 1
    %249 = vperm.xlu0 %248, %v88
    %v250 = vpop.permute.xlu0 %249
    %v252 = vmul.f32 %v51, %v246
    %v253 = vmul.f32 %v52, %v246
    %v254 = vmul.f32 %v53, %v250
    %v255 = vmul.f32 %v54, %v250
    %v256 = vmul.f32 %v55, %v246
    %v257 = vmul.f32 %v56, %v246
    %v258 = vmul.f32 %v57, %v250
    %v259 = vmul.f32 %v58, %v250
    %v260 = vmul.f32 %v59, %v246
    %v261 = vmul.f32 %v60, %v246
    %v262 = vmul.f32 %v61, %v250
    %v263 = vmul.f32 %v62, %v250
    %v264 = vmul.f32 %v63, %v246
    %v265 = vmul.f32 %v64, %v246
    %v266 = vmul.f32 %v65, %v250
    %v267 = vmul.f32 %v66, %v250
    %v268 = vmul.f32 %v67, %v246
    %v269 = vmul.f32 %v68, %v246
    %v270 = vmul.f32 %v69, %v250
    %v271 = vmul.f32 %v70, %v250
    %v272 = vmul.f32 %v71, %v246
    %v273 = vmul.f32 %v72, %v246
    %v274 = vmul.f32 %v73, %v250
    %v275 = vmul.f32 %v74, %v250
    %v276 = vmul.f32 %v75, %v246
    %v277 = vmul.f32 %v76, %v246
    %v278 = vmul.f32 %v77, %v250
    %v279 = vmul.f32 %v78, %v250
    %v280 = vmul.f32 %v79, %v246
    %v281 = vmul.f32 %v80, %v246
    %v282 = vmul.f32 %v81, %v250
    %v283 = vmul.f32 %v82, %v250
    %v284 = vadd.f32 %v252, %v254
    %v285 = vrot.slane %v284, 4
    %v286 = vadd.f32 %v284, %v285
    %v287 = vrot.slane %v286, 2
    %v288 = vadd.f32 %v286, %v287
    %v289 = vrot.slane %v288, 1
    %v290 = vadd.f32 %v288, %v289
    %v291 = vadd.f32 %v253, %v255
    %v292 = vrot.slane %v291, 4
    %v293 = vadd.f32 %v291, %v292
    %v294 = vrot.slane %v293, 2
    %v295 = vadd.f32 %v293, %v294
    %v296 = vrot.slane %v295, 1
    %v297 = vadd.f32 %v295, %v296
    %v298 = vadd.f32 %v256, %v258
    %v299 = vrot.slane %v298, 4
    %v300 = vadd.f32 %v298, %v299
    %v301 = vrot.slane %v300, 2
    %v302 = vadd.f32 %v300, %v301
    %v303 = vrot.slane %v302, 1
    %v304 = vadd.f32 %v302, %v303
    %v305 = vadd.f32 %v257, %v259
    %v306 = vrot.slane %v305, 4
    %v307 = vadd.f32 %v305, %v306
    %v308 = vrot.slane %v307, 2
    %v309 = vadd.f32 %v307, %v308
    %v310 = vrot.slane %v309, 1
    %v311 = vadd.f32 %v309, %v310
    %v312 = vadd.f32 %v260, %v262
    %v313 = vrot.slane %v312, 4
    %v314 = vadd.f32 %v312, %v313
    %v315 = vrot.slane %v314, 2
    %v316 = vadd.f32 %v314, %v315
    %v317 = vrot.slane %v316, 1
    %v318 = vadd.f32 %v316, %v317
    %v319 = vadd.f32 %v261, %v263
    %v320 = vrot.slane %v319, 4
    %v321 = vadd.f32 %v319, %v320
    %v322 = vrot.slane %v321, 2
    %v323 = vadd.f32 %v321, %v322
    %v324 = vrot.slane %v323, 1
    %v325 = vadd.f32 %v323, %v324
    %v326 = vadd.f32 %v264, %v266
    %v327 = vrot.slane %v326, 4
    %v328 = vadd.f32 %v326, %v327
    %v329 = vrot.slane %v328, 2
    %v330 = vadd.f32 %v328, %v329
    %v331 = vrot.slane %v330, 1
    %v332 = vadd.f32 %v330, %v331
    %v333 = vadd.f32 %v265, %v267
    %v334 = vrot.slane %v333, 4
    %v335 = vadd.f32 %v333, %v334
    %v336 = vrot.slane %v335, 2
    %v337 = vadd.f32 %v335, %v336
    %v338 = vrot.slane %v337, 1
    %v339 = vadd.f32 %v337, %v338
    %v340 = vadd.f32 %v268, %v270
    %v341 = vrot.slane %v340, 4
    %v342 = vadd.f32 %v340, %v341
    %v343 = vrot.slane %v342, 2
    %v344 = vadd.f32 %v342, %v343
    %v345 = vrot.slane %v344, 1
    %v346 = vadd.f32 %v344, %v345
    %v347 = vadd.f32 %v269, %v271
    %v348 = vrot.slane %v347, 4
    %v349 = vadd.f32 %v347, %v348
    %v350 = vrot.slane %v349, 2
    %v351 = vadd.f32 %v349, %v350
    %v352 = vrot.slane %v351, 1
    %v353 = vadd.f32 %v351, %v352
    %v354 = vadd.f32 %v272, %v274
    %v355 = vrot.slane %v354, 4
    %v356 = vadd.f32 %v354, %v355
    %v357 = vrot.slane %v356, 2
    %v358 = vadd.f32 %v356, %v357
    %v359 = vrot.slane %v358, 1
    %v360 = vadd.f32 %v358, %v359
    %v361 = vadd.f32 %v273, %v275
    %v362 = vrot.slane %v361, 4
    %v363 = vadd.f32 %v361, %v362
    %v364 = vrot.slane %v363, 2
    %v365 = vadd.f32 %v363, %v364
    %v366 = vrot.slane %v365, 1
    %v367 = vadd.f32 %v365, %v366
    %v368 = vadd.f32 %v276, %v278
    %v369 = vrot.slane %v368, 4
    %v370 = vadd.f32 %v368, %v369
    %v371 = vrot.slane %v370, 2
    %v372 = vadd.f32 %v370, %v371
    %v373 = vrot.slane %v372, 1
    %v374 = vadd.f32 %v372, %v373
    %v375 = vadd.f32 %v277, %v279
    %v376 = vrot.slane %v375, 4
    %v377 = vadd.f32 %v375, %v376
    %v378 = vrot.slane %v377, 2
    %v379 = vadd.f32 %v377, %v378
    %v380 = vrot.slane %v379, 1
    %v381 = vadd.f32 %v379, %v380
    %v382 = vadd.f32 %v280, %v282
    %v383 = vrot.slane %v382, 4
    %v384 = vadd.f32 %v382, %v383
    %v385 = vrot.slane %v384, 2
    %v386 = vadd.f32 %v384, %v385
    %v387 = vrot.slane %v386, 1
    %v388 = vadd.f32 %v386, %v387
    %v389 = vadd.f32 %v281, %v283
    %v390 = vrot.slane %v389, 4
    %v391 = vadd.f32 %v389, %v390
    %v392 = vrot.slane %v391, 2
    %v393 = vadd.f32 %v391, %v392
    %v394 = vrot.slane %v393, 1
    %v395 = vadd.f32 %v393, %v394
    %396 = vset.pattern.permute.xlu0 2
    %397 = vperm.xlu0 %396, %v87
    %v398 = vpop.permute.xlu0 %397
    %400 = vset.pattern.permute.xlu0 2
    %401 = vperm.xlu0 %400, %v88
    %v402 = vpop.permute.xlu0 %401
    %v404 = vmul.f32 %v51, %v398
    %v405 = vmul.f32 %v52, %v398
    %v406 = vmul.f32 %v53, %v402
    %v407 = vmul.f32 %v54, %v402
    %v408 = vmul.f32 %v55, %v398
    %v409 = vmul.f32 %v56, %v398
    %v410 = vmul.f32 %v57, %v402
    %v411 = vmul.f32 %v58, %v402
    %v412 = vmul.f32 %v59, %v398
    %v413 = vmul.f32 %v60, %v398
    %v414 = vmul.f32 %v61, %v402
    %v415 = vmul.f32 %v62, %v402
    %v416 = vmul.f32 %v63, %v398
    %v417 = vmul.f32 %v64, %v398
    %v418 = vmul.f32 %v65, %v402
    %v419 = vmul.f32 %v66, %v402
    %v420 = vmul.f32 %v67, %v398
    %v421 = vmul.f32 %v68, %v398
    %v422 = vmul.f32 %v69, %v402
    %v423 = vmul.f32 %v70, %v402
    %v424 = vmul.f32 %v71, %v398
    %v425 = vmul.f32 %v72, %v398
    %v426 = vmul.f32 %v73, %v402
    %v427 = vmul.f32 %v74, %v402
    %v428 = vmul.f32 %v75, %v398
    %v429 = vmul.f32 %v76, %v398
    %v430 = vmul.f32 %v77, %v402
    %v431 = vmul.f32 %v78, %v402
    %v432 = vmul.f32 %v79, %v398
    %v433 = vmul.f32 %v80, %v398
    %v434 = vmul.f32 %v81, %v402
    %v435 = vmul.f32 %v82, %v402
    %v436 = vadd.f32 %v404, %v406
    %v437 = vrot.slane %v436, 4
    %v438 = vadd.f32 %v436, %v437
    %v439 = vrot.slane %v438, 2
    %v440 = vadd.f32 %v438, %v439
    %v441 = vrot.slane %v440, 1
    %v442 = vadd.f32 %v440, %v441
    %v443 = vadd.f32 %v405, %v407
    %v444 = vrot.slane %v443, 4
    %v445 = vadd.f32 %v443, %v444
    %v446 = vrot.slane %v445, 2
    %v447 = vadd.f32 %v445, %v446
    %v448 = vrot.slane %v447, 1
    %v449 = vadd.f32 %v447, %v448
    %v450 = vadd.f32 %v408, %v410
    %v451 = vrot.slane %v450, 4
    %v452 = vadd.f32 %v450, %v451
    %v453 = vrot.slane %v452, 2
    %v454 = vadd.f32 %v452, %v453
    %v455 = vrot.slane %v454, 1
    %v456 = vadd.f32 %v454, %v455
    %v457 = vadd.f32 %v409, %v411
    %v458 = vrot.slane %v457, 4
    %v459 = vadd.f32 %v457, %v458
    %v460 = vrot.slane %v459, 2
    %v461 = vadd.f32 %v459, %v460
    %v462 = vrot.slane %v461, 1
    %v463 = vadd.f32 %v461, %v462
    %v464 = vadd.f32 %v412, %v414
    %v465 = vrot.slane %v464, 4
    %v466 = vadd.f32 %v464, %v465
    %v467 = vrot.slane %v466, 2
    %v468 = vadd.f32 %v466, %v467
    %v469 = vrot.slane %v468, 1
    %v470 = vadd.f32 %v468, %v469
    %v471 = vadd.f32 %v413, %v415
    %v472 = vrot.slane %v471, 4
    %v473 = vadd.f32 %v471, %v472
    %v474 = vrot.slane %v473, 2
    %v475 = vadd.f32 %v473, %v474
    %v476 = vrot.slane %v475, 1
    %v477 = vadd.f32 %v475, %v476
    %v478 = vadd.f32 %v416, %v418
    %v479 = vrot.slane %v478, 4
    %v480 = vadd.f32 %v478, %v479
    %v481 = vrot.slane %v480, 2
    %v482 = vadd.f32 %v480, %v481
    %v483 = vrot.slane %v482, 1
    %v484 = vadd.f32 %v482, %v483
    %v485 = vadd.f32 %v417, %v419
    %v486 = vrot.slane %v485, 4
    %v487 = vadd.f32 %v485, %v486
    %v488 = vrot.slane %v487, 2
    %v489 = vadd.f32 %v487, %v488
    %v490 = vrot.slane %v489, 1
    %v491 = vadd.f32 %v489, %v490
    %v492 = vadd.f32 %v420, %v422
    %v493 = vrot.slane %v492, 4
    %v494 = vadd.f32 %v492, %v493
    %v495 = vrot.slane %v494, 2
    %v496 = vadd.f32 %v494, %v495
    %v497 = vrot.slane %v496, 1
    %v498 = vadd.f32 %v496, %v497
    %v499 = vadd.f32 %v421, %v423
    %v500 = vrot.slane %v499, 4
    %v501 = vadd.f32 %v499, %v500
    %v502 = vrot.slane %v501, 2
    %v503 = vadd.f32 %v501, %v502
    %v504 = vrot.slane %v503, 1
    %v505 = vadd.f32 %v503, %v504
    %v506 = vadd.f32 %v424, %v426
    %v507 = vrot.slane %v506, 4
    %v508 = vadd.f32 %v506, %v507
    %v509 = vrot.slane %v508, 2
    %v510 = vadd.f32 %v508, %v509
    %v511 = vrot.slane %v510, 1
    %v512 = vadd.f32 %v510, %v511
    %v513 = vadd.f32 %v425, %v427
    %v514 = vrot.slane %v513, 4
    %v515 = vadd.f32 %v513, %v514
    %v516 = vrot.slane %v515, 2
    %v517 = vadd.f32 %v515, %v516
    %v518 = vrot.slane %v517, 1
    %v519 = vadd.f32 %v517, %v518
    %v520 = vadd.f32 %v428, %v430
    %v521 = vrot.slane %v520, 4
    %v522 = vadd.f32 %v520, %v521
    %v523 = vrot.slane %v522, 2
    %v524 = vadd.f32 %v522, %v523
    %v525 = vrot.slane %v524, 1
    %v526 = vadd.f32 %v524, %v525
    %v527 = vadd.f32 %v429, %v431
    %v528 = vrot.slane %v527, 4
    %v529 = vadd.f32 %v527, %v528
    %v530 = vrot.slane %v529, 2
    %v531 = vadd.f32 %v529, %v530
    %v532 = vrot.slane %v531, 1
    %v533 = vadd.f32 %v531, %v532
    %v534 = vadd.f32 %v432, %v434
    %v535 = vrot.slane %v534, 4
    %v536 = vadd.f32 %v534, %v535
    %v537 = vrot.slane %v536, 2
    %v538 = vadd.f32 %v536, %v537
    %v539 = vrot.slane %v538, 1
    %v540 = vadd.f32 %v538, %v539
    %v541 = vadd.f32 %v433, %v435
    %v542 = vrot.slane %v541, 4
    %v543 = vadd.f32 %v541, %v542
    %v544 = vrot.slane %v543, 2
    %v545 = vadd.f32 %v543, %v544
    %v546 = vrot.slane %v545, 1
    %v547 = vadd.f32 %v545, %v546
    %vm564 = vcmask 1041409
    %v565 = vsel %vm564, %v152, %v138
    %vm566 = vcmask 1042434
    %v567 = vsel %vm566, %v166, %v565
    %vm568 = vcmask 1043459
    %v569 = vsel %vm568, %v180, %v567
    %vm570 = vcmask 1044484
    %v571 = vsel %vm570, %v194, %v569
    %vm572 = vcmask 1045509
    %v573 = vsel %vm572, %v208, %v571
    %vm574 = vcmask 1046534
    %v575 = vsel %vm574, %v222, %v573
    %vm576 = vcmask 1047559
    %v577 = vsel %vm576, %v236, %v575
    %v578 = vsel %vm564, %v159, %v145
    %v579 = vsel %vm566, %v173, %v578
    %v580 = vsel %vm568, %v187, %v579
    %v581 = vsel %vm570, %v201, %v580
    %v582 = vsel %vm572, %v215, %v581
    %v583 = vsel %vm574, %v229, %v582
    %v584 = vsel %vm576, %v243, %v583
    %585 = vrot.lane.b32.xlu0 %v577, 1
    %v586 = vpop.permute.xlu0 %585
    %587 = vrot.lane.b32.xlu0 %v584, 1
    %v588 = vpop.permute.xlu0 %587
    %vm589 = vcmask 7168
    %v590 = vsel %vm589, %v586, %v588
    %v593 = vsel %vm589, 0.0, %v586
    %v610 = vsel %vm564, %v456, %v442
    %v611 = vsel %vm566, %v470, %v610
    %v612 = vsel %vm568, %v484, %v611
    %v613 = vsel %vm570, %v498, %v612
    %v614 = vsel %vm572, %v512, %v613
    %v615 = vsel %vm574, %v526, %v614
    %v616 = vsel %vm576, %v540, %v615
    %v617 = vsel %vm564, %v463, %v449
    %v618 = vsel %vm566, %v477, %v617
    %v619 = vsel %vm568, %v491, %v618
    %v620 = vsel %vm570, %v505, %v619
    %v621 = vsel %vm572, %v519, %v620
    %v622 = vsel %vm574, %v533, %v621
    %v623 = vsel %vm576, %v547, %v622
    %624 = vrot.lane.b32.xlu0 %v616, 127
    %v625 = vpop.permute.xlu0 %624
    %626 = vrot.lane.b32.xlu0 %v623, 127
    %v627 = vpop.permute.xlu0 %626
    %vm628 = vcmask 1039360
    %v629 = vsel %vm628, %v625, %v627
    %v632 = vsel %vm628, %v627, 0.0
    %v649 = vsel %vm564, %v304, %v290
    %v650 = vsel %vm566, %v318, %v649
    %v651 = vsel %vm568, %v332, %v650
    %v652 = vsel %vm570, %v346, %v651
    %v653 = vsel %vm572, %v360, %v652
    %v654 = vsel %vm574, %v374, %v653
    %v655 = vsel %vm576, %v388, %v654
    %v656 = vsel %vm564, %v311, %v297
    %v657 = vsel %vm566, %v325, %v656
    %v658 = vsel %vm568, %v339, %v657
    %v659 = vsel %vm570, %v353, %v658
    %v660 = vsel %vm572, %v367, %v659
    %v661 = vsel %vm574, %v381, %v660
    %v662 = vsel %vm576, %v395, %v661
    %v665 = vadd.f32 %v593, %v655
    %v666 = vadd.f32 %v590, %v662
    %v667 = vadd.f32 %v665, %v629
    %v668 = vadd.f32 %v666, %v632
    %v669 = vstv %s89
    %v670 = vadd.f32 %v667, %v669
    %v671 = vadd.f32 %v668, %v669
    %v672 = vxor.u32 %v670, 2147483648
    %v673 = vxor.u32 %v671, 2147483648
    %v674 = vmul.f32 %v672, 1.442695
    %v675 = vpow.pop %v674
    %v676 = vmul.f32 %v673, 1.442695
    %v677 = vpow.pop %v676
    %v678 = vadd.f32 %v675, 1.0
    %v679 = vadd.f32 %v677, 1.0
    %v680 = vrcp.pop %v678
    %v681 = vmul.f32 1.0, %v680
    %v682 = vrcp.pop %v679
    %v683 = vmul.f32 1.0, %v682
    %v684 = vadd.f32 %v681, %v83
    %v685 = vadd.f32 %v683, %v84
    %v686 = vadd.f32 %v684, %v85
    %v687 = vadd.f32 %v685, %v86
    %v688 = vmax.f32 %v686, %v687
    %689 = vmax.xlane.f32.xlu0 %v688
    %v690 = vpop.xlane.xlu0 %689
    %v691 = vsub.f32 %v686, %v690
    %v692 = vsub.f32 %v687, %v690
    %v693 = vmul.f32 %v691, 1.442695
    %v694 = vpow.pop %v693
    %v695 = vmul.f32 %v692, 1.442695
    %v696 = vpow.pop %v695
    %v697 = vadd.f32 %v694, %v696
    %698 = vadd.xlane.f32.xlu0 %v697
    %v699 = vpop.xlane.xlu0 %698
    %v700 = vrcp.pop %v699
    %v701 = vmul.f32 %v699, %v700
    %v702 = vsub.f32 2.0, %v701
    %v703 = vmul.f32 %v700, %v702
    %v704 = vmul.f32 %v694, %v703
    %v705 = vmul.f32 %v696, %v703
    %v708 = vcombine.low %v704, %v705
    %v709 = vcombine.high %v704, %v705
    %v711 = vunpack.c.l.s4 1966171168
    %v712 = vunpack.c.0.s8 %v711
    %v713 = vlaneseq
    %v714 = vshrl.u32 %v713, 7
    %v715 = vsub.s32 %v712, %v714
    %v716 = vrot.slane %v708, %v715
    %v718 = vunpack.c.l.s4 1966171168
    %v719 = vunpack.c.0.s8 %v718
    %v720 = vlaneseq
    %v721 = vshrl.u32 %v720, 7
    %v722 = vsub.s32 %v719, %v721
    %v723 = vrot.slane %v709, %v722
    %v724 = vcombine.high %v716, %v716
    %v725 = vcombine.high %v723, %v723
    %v727 = vunpack.c.l.s4 1966171168
    %v728 = vunpack.c.0.s8 %v727
    %v729 = vlaneseq
    %v730 = vshrl.u32 %v729, 7
    %v731 = vsub.s32 %v728, %v730
    %v732 = vrot.slane %v716, %v731
    %v734 = vunpack.c.l.s4 1966171168
    %v735 = vunpack.c.0.s8 %v734
    %v736 = vlaneseq
    %v737 = vshrl.u32 %v736, 7
    %v738 = vsub.s32 %v735, %v737
    %v739 = vrot.slane %v723, %v738
    %v741 = vunpack.c.l.s4 1966171168
    %v742 = vunpack.c.0.s8 %v741
    %v743 = vlaneseq
    %v744 = vshrl.u32 %v743, 7
    %v745 = vsub.s32 %v742, %v744
    %v746 = vrot.slane %v724, %v745
    %v748 = vunpack.c.l.s4 1966171168
    %v749 = vunpack.c.0.s8 %v748
    %v750 = vlaneseq
    %v751 = vshrl.u32 %v750, 7
    %v752 = vsub.s32 %v749, %v751
    %v753 = vrot.slane %v725, %v752
    %v754 = vcombine.high %v732, %v732
    %v755 = vcombine.high %v739, %v739
    %v756 = vcombine.high %v746, %v746
    %v757 = vcombine.high %v753, %v753
    %v766 = vadd.f32 %v732, 1.0
    %v767 = vadd.f32 %v746, 1.0
    %v768 = vadd.f32 %v754, 1.0
    %v769 = vadd.f32 %v756, 1.0
    %v770 = vadd.f32 %v739, 1.0
    %v771 = vadd.f32 %v753, 1.0
    %v772 = vadd.f32 %v755, 1.0
    %v773 = vadd.f32 %v757, 1.0
    %v782 = vlaneseq
    %v783 = vshrl.u32 %v782, 7
    %v784 = vsub.s32 0, %v783
    %v785 = vrot.slane %v766, %v784
    %v786 = vlaneseq
    %v787 = vshrl.u32 %v786, 7
    %v788 = vsub.s32 1, %v787
    %v789 = vrot.slane %v766, %v788
    %v790 = vlaneseq
    %v791 = vshrl.u32 %v790, 7
    %v792 = vsub.s32 0, %v791
    %v793 = vrot.slane %v767, %v792
    %v794 = vlaneseq
    %v795 = vshrl.u32 %v794, 7
    %v796 = vsub.s32 1, %v795
    %v797 = vrot.slane %v767, %v796
    %v798 = vlaneseq
    %v799 = vshrl.u32 %v798, 7
    %v800 = vsub.s32 0, %v799
    %v801 = vrot.slane %v768, %v800
    %v802 = vlaneseq
    %v803 = vshrl.u32 %v802, 7
    %v804 = vsub.s32 1, %v803
    %v805 = vrot.slane %v768, %v804
    %v806 = vlaneseq
    %v807 = vshrl.u32 %v806, 7
    %v808 = vsub.s32 0, %v807
    %v809 = vrot.slane %v769, %v808
    %v810 = vlaneseq
    %v811 = vshrl.u32 %v810, 7
    %v812 = vsub.s32 1, %v811
    %v813 = vrot.slane %v769, %v812
    %v814 = vlaneseq
    %v815 = vshrl.u32 %v814, 7
    %v816 = vsub.s32 0, %v815
    %v817 = vrot.slane %v770, %v816
    %v818 = vlaneseq
    %v819 = vshrl.u32 %v818, 7
    %v820 = vsub.s32 1, %v819
    %v821 = vrot.slane %v770, %v820
    %v822 = vlaneseq
    %v823 = vshrl.u32 %v822, 7
    %v824 = vsub.s32 0, %v823
    %v825 = vrot.slane %v771, %v824
    %v826 = vlaneseq
    %v827 = vshrl.u32 %v826, 7
    %v828 = vsub.s32 1, %v827
    %v829 = vrot.slane %v771, %v828
    %v830 = vlaneseq
    %v831 = vshrl.u32 %v830, 7
    %v832 = vsub.s32 0, %v831
    %v833 = vrot.slane %v772, %v832
    %v834 = vlaneseq
    %v835 = vshrl.u32 %v834, 7
    %v836 = vsub.s32 1, %v835
    %v837 = vrot.slane %v772, %v836
    %v838 = vlaneseq
    %v839 = vshrl.u32 %v838, 7
    %v840 = vsub.s32 0, %v839
    %v841 = vrot.slane %v773, %v840
    %v842 = vlaneseq
    %v843 = vshrl.u32 %v842, 7
    %v844 = vsub.s32 1, %v843
    %v845 = vrot.slane %v773, %v844
    %v862 = vmul.f32 %v51, %v785
    %v863 = vmul.f32 %v52, %v789
    %v864 = vmul.f32 %v53, %v785
    %v865 = vmul.f32 %v54, %v789
    %v866 = vmul.f32 %v55, %v793
    %v867 = vmul.f32 %v56, %v797
    %v868 = vmul.f32 %v57, %v793
    %v869 = vmul.f32 %v58, %v797
    %v870 = vmul.f32 %v59, %v801
    %v871 = vmul.f32 %v60, %v805
    %v872 = vmul.f32 %v61, %v801
    %v873 = vmul.f32 %v62, %v805
    %v874 = vmul.f32 %v63, %v809
    %v875 = vmul.f32 %v64, %v813
    %v876 = vmul.f32 %v65, %v809
    %v877 = vmul.f32 %v66, %v813
    %v878 = vmul.f32 %v67, %v817
    %v879 = vmul.f32 %v68, %v821
    %v880 = vmul.f32 %v69, %v817
    %v881 = vmul.f32 %v70, %v821
    %v882 = vmul.f32 %v71, %v825
    %v883 = vmul.f32 %v72, %v829
    %v884 = vmul.f32 %v73, %v825
    %v885 = vmul.f32 %v74, %v829
    %v886 = vmul.f32 %v75, %v833
    %v887 = vmul.f32 %v76, %v837
    %v888 = vmul.f32 %v77, %v833
    %v889 = vmul.f32 %v78, %v837
    %v890 = vmul.f32 %v79, %v841
    %v891 = vmul.f32 %v80, %v845
    %v892 = vmul.f32 %v81, %v841
    %v893 = vmul.f32 %v82, %v845
    %894 = vst [vmem:[#allocation8] sm:$0xff] %v862
    %895 = vst [vmem:[#allocation8 + $0x8] sm:$0xff] %v863
    %896 = vst [vmem:[#allocation8 + $0x10] sm:$0xff] %v864
    %897 = vst [vmem:[#allocation8 + $0x18] sm:$0xff] %v865
    %898 = vst [vmem:[#allocation8 + $0x20] sm:$0xff] %v866
    %899 = vst [vmem:[#allocation8 + $0x28] sm:$0xff] %v867
    %900 = vst [vmem:[#allocation8 + $0x30] sm:$0xff] %v868
    %901 = vst [vmem:[#allocation8 + $0x38] sm:$0xff] %v869
    %902 = vst [vmem:[#allocation8 + $0x40] sm:$0xff] %v870
    %903 = vst [vmem:[#allocation8 + $0x48] sm:$0xff] %v871
    %904 = vst [vmem:[#allocation8 + $0x50] sm:$0xff] %v872
    %905 = vst [vmem:[#allocation8 + $0x58] sm:$0xff] %v873
    %906 = vst [vmem:[#allocation8 + $0x60] sm:$0xff] %v874
    %907 = vst [vmem:[#allocation8 + $0x68] sm:$0xff] %v875
    %908 = vst [vmem:[#allocation8 + $0x70] sm:$0xff] %v876
    %909 = vst [vmem:[#allocation8 + $0x78] sm:$0xff] %v877
    %910 = vst [vmem:[#allocation8 + $0x80] sm:$0xff] %v878
    %911 = vst [vmem:[#allocation8 + $0x88] sm:$0xff] %v879
    %912 = vst [vmem:[#allocation8 + $0x90] sm:$0xff] %v880
    %913 = vst [vmem:[#allocation8 + $0x98] sm:$0xff] %v881
    %914 = vst [vmem:[#allocation8 + $0xa0] sm:$0xff] %v882
    %915 = vst [vmem:[#allocation8 + $0xa8] sm:$0xff] %v883
    %916 = vst [vmem:[#allocation8 + $0xb0] sm:$0xff] %v884
    %917 = vst [vmem:[#allocation8 + $0xb8] sm:$0xff] %v885
    %918 = vst [vmem:[#allocation8 + $0xc0] sm:$0xff] %v886
    %919 = vst [vmem:[#allocation8 + $0xc8] sm:$0xff] %v887
    %920 = vst [vmem:[#allocation8 + $0xd0] sm:$0xff] %v888
    %921 = vst [vmem:[#allocation8 + $0xd8] sm:$0xff] %v889
    %922 = vst [vmem:[#allocation8 + $0xe0] sm:$0xff] %v890
    %923 = vst [vmem:[#allocation8 + $0xe8] sm:$0xff] %v891
    %924 = vst [vmem:[#allocation8 + $0xf0] sm:$0xff] %v892
    %925 = vst [vmem:[#allocation8 + $0xf8] sm:$0xff] %v893
    %926 = vst [vmem:[#allocation9] sm:$0xff] %v704
    %927 = vst [vmem:[#allocation9 + $0x8] sm:$0xff] %v705
    // Predicated region
    $region30: #{tpu_custom_call.1} parent=1 // pred_check
      _
    $region31: #{tpu_custom_call.1} parent=1 // pred_check_branch
      %929 = sbr.rel (0) target = $region33
    $region32: #{tpu_custom_call.1} parent=1 // pred_region
      %s931 = ssub.s32 4096, 4096
      %932 = vsyncadd [#allocation5], %s931
      %s933 = sshll.u32 [#allocation8], 4
      %s934 = int_to_ptr.vmem [resolvable:$true] %s933
      %939 = dma.vmem_to_hbm [thread:$0]  %s934, 4096, %s5, [#allocation5], 256, 256, 16
    $region33: #{tpu_custom_call.1} parent=1 // pred_fallthru
      _
    // Predicated region
    $region34: #{tpu_custom_call.1} parent=1 // pred_check
      _
    $region35: #{tpu_custom_call.1} parent=1 // pred_check_branch
      %941 = sbr.rel (0) target = $region37
    $region36: #{tpu_custom_call.1} parent=1 // pred_region
      %s943 = ssub.s32 256, 256
      %944 = vsyncadd [#allocation10], %s943
      %s946 = sshll.u32 [#allocation9], 4
      %s947 = int_to_ptr.vmem [resolvable:$true] %s946
      %949 = dma.vmem_to_hbm [thread:$0]  %s947, 256, %s6, [#allocation10]
    $region37: #{tpu_custom_call.1} parent=1 // pred_fallthru
      _
    // Predicated region
    $region38: #{tpu_custom_call.1} parent=1 // pred_check
      _
    $region39: #{tpu_custom_call.1} parent=1 // pred_check_branch
      %951 = sbr.rel (0) target = $region41
    $region40: #{tpu_custom_call.1} parent=1 // pred_region
      %952 = dma.done [#allocation5], 4096
    $region41: #{tpu_custom_call.1} parent=1 // pred_fallthru
      _
    // Predicated region
    $region42: #{tpu_custom_call.1} parent=1 // pred_check
      _
    $region43: #{tpu_custom_call.1} parent=1 // pred_check_branch
      %954 = sbr.rel (0) target = $region45
    $region44: #{tpu_custom_call.1} parent=1 // pred_region
      %955 = dma.done [#allocation10], 256
    $region45: #{tpu_custom_call.1} parent=1 // pred_fallthru
      _
    %956 = vsyncpa [#allocation4], 1
    %957 = vsyncpa [#allocation7], 1
    %958 = vsyncpa [#allocation5], 1
    %959 = vsyncpa [#allocation10], 1

</llo_original>
